<compile_context>
chip_gen: v7x
topology: tpu7x:2x2x1
jax: 0.10.0
libtpu: 0.0.40
codegen_flags: <defaults>
</compile_context>

<pallas_src>
import jax
import jax.numpy as jnp
from jax.experimental import pallas as pl
from jax.experimental.pallas import tpu as pltpu


def encoder_kernel(xc_ref, yc_ref,
                   w1x_ref, w1y_ref, b1_ref,
                   w2_ref, b2_ref, w3_ref, b3_ref, w4_ref, b4_ref,
                   w5_ref, b5_ref, w6_ref, b6_ref,
                   o_ref):
    BB, N, dx = xc_ref.shape
    dy = yc_ref.shape[-1]
    H = o_ref.shape[-1]

    # Flatten (BB, N, ·) -> (BB*N, ·): MXU M dimension becomes BB*N.
    # (N is a multiple of the 8-sublane tiling here, so this is layout-free.)
    xc = xc_ref[...].reshape(BB * N, dx)          # bf16
    yc = yc_ref[...].reshape(BB * N, dy)          # bf16

    def dense(a_f32, w_ref, b_ref, relu):
        acc = jnp.dot(a_f32.astype(jnp.bfloat16), w_ref[...],
                      preferred_element_type=jnp.float32) + b_ref[...]
        return jnp.maximum(acc, 0.0) if relu else acc

    # ---- net_pre (pre_depth=4). Layer 1 is split over xc / yc so no concat
    #      is ever materialized in HBM.
    h = (jnp.dot(xc, w1x_ref[...], preferred_element_type=jnp.float32)
         + jnp.dot(yc, w1y_ref[...], preferred_element_type=jnp.float32)
         + b1_ref[...])
    h = jnp.maximum(h, 0.0)
    h = dense(h, w2_ref, b2_ref, relu=True)
    h = dense(h, w3_ref, b3_ref, relu=True)
    h = dense(h, w4_ref, b4_ref, relu=False)      # (BB*N, H) f32

    # ---- aggregation: mean over the set axis (-2 in PyTorch).
    pooled = jnp.mean(h.reshape(BB, N, H), axis=1)   # (BB, H) f32

    # ---- net_post (post_depth=2, use_lat=False), batched over BB rows.
    p = dense(pooled, w5_ref, b5_ref, relu=True)
    out = dense(p, w6_ref, b6_ref, relu=False)

    o_ref[...] = out.astype(o_ref.dtype)          # (BB, H) lane-dense tile


def pooling_encoder(xc, yc, params, *, block_b=None):
    """xc: (B, N, dim_x), yc: (B, N, dim_y) -> (B, dim_hid) (float32)."""
    B, N, dim_x = xc.shape
    dim_y = yc.shape[-1]
    H = params["w1"].shape[1]

    # Pick the batch block so that BB*N fills the MXU M dimension (~256 rows).
    if block_b is None:
        block_b = min(B, max(8, pl.cdiv(256, N)))
    if block_b < B:
        # keep the (BB, H) output tile sublane-aligned when the batch is split
        block_b = min(B, ((block_b + 7) // 8) * 8)
    grid = (pl.cdiv(B, block_b),)

    bf = lambda a: a.astype(jnp.bfloat16)
    w1 = params["w1"]
    # Matmul operands in bf16 (f32 accumulation in-kernel); biases stay f32.
    weight_args = [
        bf(w1[:dim_x]), bf(w1[dim_x:]), params["b1"].astype(jnp.float32),
        bf(params["w2"]), params["b2"].astype(jnp.float32),
        bf(params["w3"]), params["b3"].astype(jnp.float32),
        bf(params["w4"]), params["b4"].astype(jnp.float32),
        bf(params["w5"]), params["b5"].astype(jnp.float32),
        bf(params["w6"]), params["b6"].astype(jnp.float32),
    ]

    # Replicated (full-array) weight/bias blocks; xc/yc tiled over batch blocks.
    rep = lambda a: pl.BlockSpec(a.shape, lambda b: (0,) * a.ndim)
    in_specs = ([pl.BlockSpec((block_b, N, dim_x), lambda b: (b, 0, 0)),
                 pl.BlockSpec((block_b, N, dim_y), lambda b: (b, 0, 0))]
                + [rep(a) for a in weight_args])

    return pl.pallas_call(
        encoder_kernel,
        out_shape=jax.ShapeDtypeStruct((B, H), jnp.float32),
        grid=grid,
        in_specs=in_specs,
        out_specs=pl.BlockSpec((block_b, H), lambda b: (b, 0)),
        compiler_params=pltpu.CompilerParams(
            dimension_semantics=("parallel",)),
    )(bf(xc), bf(yc), *weight_args)


def init_params(key, dim_in, dim_hid):
    """Deterministic synthetic init. Weights stored (in, out); biases (1, out)."""
    ks = jax.random.split(key, 6)

    def lin(k, fan_in, fan_out):
        w = jax.random.normal(k, (fan_in, fan_out), jnp.float32) / jnp.sqrt(fan_in)
        b = jnp.full((1, fan_out), 0.01, jnp.float32)
        return w, b

    p = {}
    p["w1"], p["b1"] = lin(ks[0], dim_in, dim_hid)    # net_pre layer 1
    p["w2"], p["b2"] = lin(ks[1], dim_hid, dim_hid)   # net_pre layer 2
    p["w3"], p["b3"] = lin(ks[2], dim_hid, dim_hid)   # net_pre layer 3
    p["w4"], p["b4"] = lin(ks[3], dim_hid, dim_hid)   # net_pre layer 4 (no ReLU)
    p["w5"], p["b5"] = lin(ks[4], dim_hid, dim_hid)   # net_post layer 1
    p["w6"], p["b6"] = lin(ks[5], dim_hid, dim_hid)   # net_post layer 2 (no ReLU)
    return p


def pooling_encoder_ref(xc, yc, params):
    """Pure-JAX f32 reference mirroring the PyTorch forward (mask=None, no latent)."""
    x = jnp.concatenate([xc, yc], axis=-1).astype(jnp.float32)
    h = jnp.maximum(x @ params["w1"] + params["b1"], 0.0)
    h = jnp.maximum(h @ params["w2"] + params["b2"], 0.0)
    h = jnp.maximum(h @ params["w3"] + params["b3"], 0.0)
    h = h @ params["w4"] + params["b4"]
    pooled = h.mean(axis=-2)
    p = jnp.maximum(pooled @ params["w5"] + params["b5"][0], 0.0)
    return p @ params["w6"] + params["b6"][0]


def pooling_encoder_ref_bf16(xc, yc, params):
    """Mirror of the kernel's bf16-matmul / f32-accumulate numerics."""
    bf = jnp.bfloat16
    dim_x = xc.shape[-1]

    def dense(a, w, b, relu):
        acc = jnp.dot(a.astype(bf), w.astype(bf),
                      preferred_element_type=jnp.float32) + b
        return jnp.maximum(acc, 0.0) if relu else acc

    w1 = params["w1"]
    h = (jnp.dot(xc.astype(bf), w1[:dim_x].astype(bf),
                 preferred_element_type=jnp.float32)
         + jnp.dot(yc.astype(bf), w1[dim_x:].astype(bf),
                   preferred_element_type=jnp.float32)
         + params["b1"])
    h = jnp.maximum(h, 0.0)
    h = dense(h, params["w2"], params["b2"], True)
    h = dense(h, params["w3"], params["b3"], True)
    h = dense(h, params["w4"], params["b4"], False)
    pooled = h.mean(axis=-2)
    p = dense(pooled, params["w5"], params["b5"], True)
    return dense(p, params["w6"], params["b6"], False)


if __name__ == "__main__":
    B, N = 2, 8            # batch, context-set size
    dim_x, dim_y = 3, 1
    dim_hid = 32

    key = jax.random.PRNGKey(0)
    kx, ky, kp = jax.random.split(key, 3)
    xc = jax.random.normal(kx, (B, N, dim_x), jnp.float32)
    yc = jax.random.normal(ky, (B, N, dim_y), jnp.float32)
    params = init_params(kp, dim_x + dim_y, dim_hid)

    out = jax.block_until_ready(pooling_encoder(xc, yc, params))
    assert out.shape == (B, dim_hid)

    ref_bf16 = pooling_encoder_ref_bf16(xc, yc, params)
    ref_f32 = pooling_encoder_ref(xc, yc, params)
    assert jnp.allclose(out, ref_bf16, atol=2e-2, rtol=2e-2), \
        "mismatch vs bf16-mirror JAX reference"
    assert jnp.allclose(out, ref_f32, atol=5e-2, rtol=5e-2), \
        "mismatch vs f32 JAX reference"

    print("KERNEL_OK")
</pallas_src>

<mosaic_0001>
module attributes {stable_mosaic.version = 11 : i64} {
  func.func @encoder_kernel(%arg0: i32, %arg1: memref<2x8x3xbf16, #tpu.memory_space<vmem>>, %arg2: memref<2x8x1xbf16, #tpu.memory_space<vmem>>, %arg3: memref<3x32xbf16, #tpu.memory_space<vmem>>, %arg4: memref<1x32xbf16, #tpu.memory_space<vmem>>, %arg5: memref<1x32xf32, #tpu.memory_space<vmem>>, %arg6: memref<32x32xbf16, #tpu.memory_space<vmem>>, %arg7: memref<1x32xf32, #tpu.memory_space<vmem>>, %arg8: memref<32x32xbf16, #tpu.memory_space<vmem>>, %arg9: memref<1x32xf32, #tpu.memory_space<vmem>>, %arg10: memref<32x32xbf16, #tpu.memory_space<vmem>>, %arg11: memref<1x32xf32, #tpu.memory_space<vmem>>, %arg12: memref<32x32xbf16, #tpu.memory_space<vmem>>, %arg13: memref<1x32xf32, #tpu.memory_space<vmem>>, %arg14: memref<32x32xbf16, #tpu.memory_space<vmem>>, %arg15: memref<1x32xf32, #tpu.memory_space<vmem>>, %arg16: memref<2x32xf32, #tpu.memory_space<vmem>>) attributes {dimension_semantics = [#tpu.dimension_semantics<parallel>], iteration_bounds = array<i64: 1>, scalar_prefetch = 0 : i64, scratch_operands = 0 : i64, tpu.core_type = #tpu.core_type<tc>, window_params = [{transform_indices = @transform_0, window_bounds = array<i64: 2, 8, 3>}, {transform_indices = @transform_1, window_bounds = array<i64: 2, 8, 1>}, {pipeline_mode = #tpu.pipeline_mode<synchronous>, transform_indices = @transform_2, window_bounds = array<i64: 3, 32>}, {pipeline_mode = #tpu.pipeline_mode<synchronous>, transform_indices = @transform_3, window_bounds = array<i64: 1, 32>}, {pipeline_mode = #tpu.pipeline_mode<synchronous>, transform_indices = @transform_4, window_bounds = array<i64: 1, 32>}, {pipeline_mode = #tpu.pipeline_mode<synchronous>, transform_indices = @transform_5, window_bounds = array<i64: 32, 32>}, {pipeline_mode = #tpu.pipeline_mode<synchronous>, transform_indices = @transform_6, window_bounds = array<i64: 1, 32>}, {pipeline_mode = #tpu.pipeline_mode<synchronous>, transform_indices = @transform_7, window_bounds = array<i64: 32, 32>}, {pipeline_mode = #tpu.pipeline_mode<synchronous>, transform_indices = @transform_8, window_bounds = array<i64: 1, 32>}, {pipeline_mode = #tpu.pipeline_mode<synchronous>, transform_indices = @transform_9, window_bounds = array<i64: 32, 32>}, {pipeline_mode = #tpu.pipeline_mode<synchronous>, transform_indices = @transform_10, window_bounds = array<i64: 1, 32>}, {pipeline_mode = #tpu.pipeline_mode<synchronous>, transform_indices = @transform_11, window_bounds = array<i64: 32, 32>}, {pipeline_mode = #tpu.pipeline_mode<synchronous>, transform_indices = @transform_12, window_bounds = array<i64: 1, 32>}, {pipeline_mode = #tpu.pipeline_mode<synchronous>, transform_indices = @transform_13, window_bounds = array<i64: 32, 32>}, {pipeline_mode = #tpu.pipeline_mode<synchronous>, transform_indices = @transform_14, window_bounds = array<i64: 1, 32>}, {transform_indices = @transform_15, window_bounds = array<i64: 2, 32>}]} {
    %c0 = arith.constant 0 : index
    %c0_0 = arith.constant 0 : index
    %c0_1 = arith.constant 0 : index
    %0 = vector.load %arg1[%c0, %c0_0, %c0_1] : memref<2x8x3xbf16, #tpu.memory_space<vmem>>, vector<2x8x3xbf16>
    %1 = vector.shape_cast %0 : vector<2x8x3xbf16> to vector<16x3xbf16>
    %c0_2 = arith.constant 0 : index
    %c0_3 = arith.constant 0 : index
    %c0_4 = arith.constant 0 : index
    %2 = vector.load %arg2[%c0_2, %c0_3, %c0_4] : memref<2x8x1xbf16, #tpu.memory_space<vmem>>, vector<2x8x1xbf16>
    %3 = vector.shape_cast %2 : vector<2x8x1xbf16> to vector<16x1xbf16>
    %c0_5 = arith.constant 0 : index
    %c0_6 = arith.constant 0 : index
    %4 = vector.load %arg3[%c0_5, %c0_6] : memref<3x32xbf16, #tpu.memory_space<vmem>>, vector<3x32xbf16>
    %cst = arith.constant dense<0.000000e+00> : vector<16x32xf32>
    %5 = tpu.matmul %1, %4, %cst {dimension_numbers = #tpu.dot_dimension_numbers<[1], [0], [0], [1], [0, 0, 1, 1], [], []>} : vector<16x3xbf16>, vector<3x32xbf16>, vector<16x32xf32> -> vector<16x32xf32>
    %c0_7 = arith.constant 0 : index
    %c0_8 = arith.constant 0 : index
    %6 = vector.load %arg4[%c0_7, %c0_8] : memref<1x32xbf16, #tpu.memory_space<vmem>>, vector<1x32xbf16>
    %cst_9 = arith.constant dense<0.000000e+00> : vector<16x32xf32>
    %7 = tpu.matmul %3, %6, %cst_9 {dimension_numbers = #tpu.dot_dimension_numbers<[1], [0], [0], [1], [0, 0, 1, 1], [], []>} : vector<16x1xbf16>, vector<1x32xbf16>, vector<16x32xf32> -> vector<16x32xf32>
    %8 = arith.addf %5, %7 : vector<16x32xf32>
    %c0_10 = arith.constant 0 : index
    %c0_11 = arith.constant 0 : index
    %9 = vector.load %arg5[%c0_10, %c0_11] : memref<1x32xf32, #tpu.memory_space<vmem>>, vector<1x32xf32>
    %10 = vector.broadcast %9 : vector<1x32xf32> to vector<16x32xf32>
    %11 = arith.addf %8, %10 : vector<16x32xf32>
    %cst_12 = arith.constant 0.000000e+00 : f32
    %12 = vector.broadcast %cst_12 : f32 to vector<16x32xf32>
    %13 = arith.maximumf %11, %12 : vector<16x32xf32>
    %14 = arith.truncf %13 : vector<16x32xf32> to vector<16x32xbf16>
    %c0_13 = arith.constant 0 : index
    %c0_14 = arith.constant 0 : index
    %15 = vector.load %arg6[%c0_13, %c0_14] : memref<32x32xbf16, #tpu.memory_space<vmem>>, vector<32x32xbf16>
    %cst_15 = arith.constant dense<0.000000e+00> : vector<16x32xf32>
    %16 = tpu.matmul %14, %15, %cst_15 {dimension_numbers = #tpu.dot_dimension_numbers<[1], [0], [0], [1], [0, 0, 1, 1], [], []>} : vector<16x32xbf16>, vector<32x32xbf16>, vector<16x32xf32> -> vector<16x32xf32>
    %c0_16 = arith.constant 0 : index
    %c0_17 = arith.constant 0 : index
    %17 = vector.load %arg7[%c0_16, %c0_17] : memref<1x32xf32, #tpu.memory_space<vmem>>, vector<1x32xf32>
    %18 = vector.broadcast %17 : vector<1x32xf32> to vector<16x32xf32>
    %19 = arith.addf %16, %18 : vector<16x32xf32>
    %cst_18 = arith.constant 0.000000e+00 : f32
    %20 = vector.broadcast %cst_18 : f32 to vector<16x32xf32>
    %21 = arith.maximumf %19, %20 : vector<16x32xf32>
    %22 = arith.truncf %21 : vector<16x32xf32> to vector<16x32xbf16>
    %c0_19 = arith.constant 0 : index
    %c0_20 = arith.constant 0 : index
    %23 = vector.load %arg8[%c0_19, %c0_20] : memref<32x32xbf16, #tpu.memory_space<vmem>>, vector<32x32xbf16>
    %cst_21 = arith.constant dense<0.000000e+00> : vector<16x32xf32>
    %24 = tpu.matmul %22, %23, %cst_21 {dimension_numbers = #tpu.dot_dimension_numbers<[1], [0], [0], [1], [0, 0, 1, 1], [], []>} : vector<16x32xbf16>, vector<32x32xbf16>, vector<16x32xf32> -> vector<16x32xf32>
    %c0_22 = arith.constant 0 : index
    %c0_23 = arith.constant 0 : index
    %25 = vector.load %arg9[%c0_22, %c0_23] : memref<1x32xf32, #tpu.memory_space<vmem>>, vector<1x32xf32>
    %26 = vector.broadcast %25 : vector<1x32xf32> to vector<16x32xf32>
    %27 = arith.addf %24, %26 : vector<16x32xf32>
    %cst_24 = arith.constant 0.000000e+00 : f32
    %28 = vector.broadcast %cst_24 : f32 to vector<16x32xf32>
    %29 = arith.maximumf %27, %28 : vector<16x32xf32>
    %30 = arith.truncf %29 : vector<16x32xf32> to vector<16x32xbf16>
    %c0_25 = arith.constant 0 : index
    %c0_26 = arith.constant 0 : index
    %31 = vector.load %arg10[%c0_25, %c0_26] : memref<32x32xbf16, #tpu.memory_space<vmem>>, vector<32x32xbf16>
    %cst_27 = arith.constant dense<0.000000e+00> : vector<16x32xf32>
    %32 = tpu.matmul %30, %31, %cst_27 {dimension_numbers = #tpu.dot_dimension_numbers<[1], [0], [0], [1], [0, 0, 1, 1], [], []>} : vector<16x32xbf16>, vector<32x32xbf16>, vector<16x32xf32> -> vector<16x32xf32>
    %c0_28 = arith.constant 0 : index
    %c0_29 = arith.constant 0 : index
    %33 = vector.load %arg11[%c0_28, %c0_29] : memref<1x32xf32, #tpu.memory_space<vmem>>, vector<1x32xf32>
    %34 = vector.broadcast %33 : vector<1x32xf32> to vector<16x32xf32>
    %35 = arith.addf %32, %34 : vector<16x32xf32>
    %36 = vector.shape_cast %35 : vector<16x32xf32> to vector<2x8x32xf32>
    %cst_30 = arith.constant dense<0.000000e+00> : vector<2x32xf32>
    %37 = vector.multi_reduction <add>, %36, %cst_30 [1] : vector<2x8x32xf32> to vector<2x32xf32>
    %cst_31 = arith.constant 8.000000e+00 : f32
    %38 = vector.broadcast %cst_31 : f32 to vector<2x32xf32>
    %39 = arith.divf %37, %38 : vector<2x32xf32>
    %40 = arith.truncf %39 : vector<2x32xf32> to vector<2x32xbf16>
    %c0_32 = arith.constant 0 : index
    %c0_33 = arith.constant 0 : index
    %41 = vector.load %arg12[%c0_32, %c0_33] : memref<32x32xbf16, #tpu.memory_space<vmem>>, vector<32x32xbf16>
    %cst_34 = arith.constant dense<0.000000e+00> : vector<2x32xf32>
    %42 = tpu.matmul %40, %41, %cst_34 {dimension_numbers = #tpu.dot_dimension_numbers<[1], [0], [0], [1], [0, 0, 1, 1], [], []>} : vector<2x32xbf16>, vector<32x32xbf16>, vector<2x32xf32> -> vector<2x32xf32>
    %c0_35 = arith.constant 0 : index
    %c0_36 = arith.constant 0 : index
    %43 = vector.load %arg13[%c0_35, %c0_36] : memref<1x32xf32, #tpu.memory_space<vmem>>, vector<1x32xf32>
    %44 = vector.broadcast %43 : vector<1x32xf32> to vector<2x32xf32>
    %45 = arith.addf %42, %44 : vector<2x32xf32>
    %cst_37 = arith.constant 0.000000e+00 : f32
    %46 = vector.broadcast %cst_37 : f32 to vector<2x32xf32>
    %47 = arith.maximumf %45, %46 : vector<2x32xf32>
    %48 = arith.truncf %47 : vector<2x32xf32> to vector<2x32xbf16>
    %c0_38 = arith.constant 0 : index
    %c0_39 = arith.constant 0 : index
    %49 = vector.load %arg14[%c0_38, %c0_39] : memref<32x32xbf16, #tpu.memory_space<vmem>>, vector<32x32xbf16>
    %cst_40 = arith.constant dense<0.000000e+00> : vector<2x32xf32>
    %50 = tpu.matmul %48, %49, %cst_40 {dimension_numbers = #tpu.dot_dimension_numbers<[1], [0], [0], [1], [0, 0, 1, 1], [], []>} : vector<2x32xbf16>, vector<32x32xbf16>, vector<2x32xf32> -> vector<2x32xf32>
    %c0_41 = arith.constant 0 : index
    %c0_42 = arith.constant 0 : index
    %51 = vector.load %arg15[%c0_41, %c0_42] : memref<1x32xf32, #tpu.memory_space<vmem>>, vector<1x32xf32>
    %52 = vector.broadcast %51 : vector<1x32xf32> to vector<2x32xf32>
    %53 = arith.addf %50, %52 : vector<2x32xf32>
    %c0_43 = arith.constant 0 : index
    %c0_44 = arith.constant 0 : index
    %54 = vector.load %arg16[%c0_43, %c0_44] : memref<2x32xf32, #tpu.memory_space<vmem>>, vector<2x32xf32>
    tpu.vector_store %arg16[%c0_43, %c0_44], %53 {strides = array<i32>} : memref<2x32xf32, #tpu.memory_space<vmem>>, vector<2x32xf32>,
    return
  }
  func.func @transform_0(%arg0: i32) -> (i32, i32, i32) {
    %c0_i32 = arith.constant 0 : i32
    %c0_i32_0 = arith.constant 0 : i32
    %c0_i32_1 = arith.constant 0 : i32
    return %arg0, %c0_i32, %c0_i32_0 : i32, i32, i32
  }
  func.func @transform_1(%arg0: i32) -> (i32, i32, i32) {
    %c0_i32 = arith.constant 0 : i32
    %c0_i32_0 = arith.constant 0 : i32
    %c0_i32_1 = arith.constant 0 : i32
    return %arg0, %c0_i32, %c0_i32_0 : i32, i32, i32
  }
  func.func @transform_2(%arg0: i32) -> (i32, i32) {
    %c0_i32 = arith.constant 0 : i32
    %c0_i32_0 = arith.constant 0 : i32
    %c0_i32_1 = arith.constant 0 : i32
    return %c0_i32, %c0_i32_0 : i32, i32
  }
  func.func @transform_3(%arg0: i32) -> (i32, i32) {
    %c0_i32 = arith.constant 0 : i32
    %c0_i32_0 = arith.constant 0 : i32
    %c0_i32_1 = arith.constant 0 : i32
    return %c0_i32, %c0_i32_0 : i32, i32
  }
  func.func @transform_4(%arg0: i32) -> (i32, i32) {
    %c0_i32 = arith.constant 0 : i32
    %c0_i32_0 = arith.constant 0 : i32
    %c0_i32_1 = arith.constant 0 : i32
    return %c0_i32, %c0_i32_0 : i32, i32
  }
  func.func @transform_5(%arg0: i32) -> (i32, i32) {
    %c0_i32 = arith.constant 0 : i32
    %c0_i32_0 = arith.constant 0 : i32
    %c0_i32_1 = arith.constant 0 : i32
    return %c0_i32, %c0_i32_0 : i32, i32
  }
  func.func @transform_6(%arg0: i32) -> (i32, i32) {
    %c0_i32 = arith.constant 0 : i32
    %c0_i32_0 = arith.constant 0 : i32
    %c0_i32_1 = arith.constant 0 : i32
    return %c0_i32, %c0_i32_0 : i32, i32
  }
  func.func @transform_7(%arg0: i32) -> (i32, i32) {
    %c0_i32 = arith.constant 0 : i32
    %c0_i32_0 = arith.constant 0 : i32
    %c0_i32_1 = arith.constant 0 : i32
    return %c0_i32, %c0_i32_0 : i32, i32
  }
  func.func @transform_8(%arg0: i32) -> (i32, i32) {
    %c0_i32 = arith.constant 0 : i32
    %c0_i32_0 = arith.constant 0 : i32
    %c0_i32_1 = arith.constant 0 : i32
    return %c0_i32, %c0_i32_0 : i32, i32
  }
  func.func @transform_9(%arg0: i32) -> (i32, i32) {
    %c0_i32 = arith.constant 0 : i32
    %c0_i32_0 = arith.constant 0 : i32
    %c0_i32_1 = arith.constant 0 : i32
    return %c0_i32, %c0_i32_0 : i32, i32
  }
  func.func @transform_10(%arg0: i32) -> (i32, i32) {
    %c0_i32 = arith.constant 0 : i32
    %c0_i32_0 = arith.constant 0 : i32
    %c0_i32_1 = arith.constant 0 : i32
    return %c0_i32, %c0_i32_0 : i32, i32
  }
  func.func @transform_11(%arg0: i32) -> (i32, i32) {
    %c0_i32 = arith.constant 0 : i32
    %c0_i32_0 = arith.constant 0 : i32
    %c0_i32_1 = arith.constant 0 : i32
    return %c0_i32, %c0_i32_0 : i32, i32
  }
  func.func @transform_12(%arg0: i32) -> (i32, i32) {
    %c0_i32 = arith.constant 0 : i32
    %c0_i32_0 = arith.constant 0 : i32
    %c0_i32_1 = arith.constant 0 : i32
    return %c0_i32, %c0_i32_0 : i32, i32
  }
  func.func @transform_13(%arg0: i32) -> (i32, i32) {
    %c0_i32 = arith.constant 0 : i32
    %c0_i32_0 = arith.constant 0 : i32
    %c0_i32_1 = arith.constant 0 : i32
    return %c0_i32, %c0_i32_0 : i32, i32
  }
  func.func @transform_14(%arg0: i32) -> (i32, i32) {
    %c0_i32 = arith.constant 0 : i32
    %c0_i32_0 = arith.constant 0 : i32
    %c0_i32_1 = arith.constant 0 : i32
    return %c0_i32, %c0_i32_0 : i32, i32
  }
  func.func @transform_15(%arg0: i32) -> (i32, i32) {
    %c0_i32 = arith.constant 0 : i32
    %c0_i32_0 = arith.constant 0 : i32
    return %arg0, %c0_i32 : i32, i32
  }
}

</mosaic_0001>

<llo_original>
// kernel: tpu_custom_call.1
$region0: #{tpu_custom_call.1}
  #allocation0 [shape = 'u32[]', space=smem, size = 0x4, offset = 0x4, fixed_abs, tag = 'smem constant byte address 0x4 - core index']
  #allocation1 [shape = 'u32[144,128]{1,0:T(1,128)}', space=vmem, size = 0x12000, scoped, tag = 'internal scratch']
  %s0 = inlined_call_operand.vmem [shape: bf16[2,8,3], index: 0, kind: input, shape index: {}]
  %s1 = inlined_call_operand.vmem [shape: bf16[2,8,1], index: 1, kind: input, shape index: {}]
  %s2 = inlined_call_operand.hbm [shape: bf16[3,32], index: 2, kind: input, shape index: {}]
  %s3 = inlined_call_operand.vmem [shape: bf16[1,32], index: 3, kind: input, shape index: {}]
  %s4 = inlined_call_operand.hbm [shape: f32[1,32], index: 4, kind: input, shape index: {}]
  %s5 = inlined_call_operand.vmem [shape: bf16[32,32], index: 5, kind: input, shape index: {}]
  %s6 = inlined_call_operand.hbm [shape: f32[1,32], index: 6, kind: input, shape index: {}]
  %s7 = inlined_call_operand.vmem [shape: bf16[32,32], index: 7, kind: input, shape index: {}]
  %s8 = inlined_call_operand.hbm [shape: f32[1,32], index: 8, kind: input, shape index: {}]
  %s9 = inlined_call_operand.vmem [shape: bf16[32,32], index: 9, kind: input, shape index: {}]
  %s10 = inlined_call_operand.hbm [shape: f32[1,32], index: 10, kind: input, shape index: {}]
  %s11 = inlined_call_operand.hbm [shape: bf16[32,32], index: 11, kind: input, shape index: {}]
  %s12 = inlined_call_operand.hbm [shape: f32[1,32], index: 12, kind: input, shape index: {}]
  %s13 = inlined_call_operand.vmem [shape: bf16[32,32], index: 13, kind: input, shape index: {}]
  %s14 = inlined_call_operand.vmem [shape: f32[1,32], index: 14, kind: input, shape index: {}]
  %s15 = inlined_call_operand.hbm [shape: f32[2,32], index: 15, kind: output, shape index: {}]
  %s16 = sld [smem:[#allocation0]]
  $region98: #{tpu_custom_call.1} parent=0
    _
  %s18 = ssub.s32 1, %s16
  %s19 = scalar_select 0, %s18, %s16
  $region1: #{tpu_custom_call.1} parent=0
    #allocation2 [shape = 'u8[1024]{0}', space=vmem, size = 0x400, scoped, tag = 'input window, operand 2, single buffered']
    #allocation3 [shape = 's32[1]{0}', space=sflag, size = 0x4, scoped, tag = 'scoped memory for tpu_custom_call.1']
    #allocation4 [shape = 's32[1]{0}', space=sflag, size = 0x4, scoped, tag = 'scoped memory for tpu_custom_call.1']
    #allocation5 [shape = 'u8[512]{0}', space=vmem, size = 0x400, scoped, tag = 'input window, operand 4, single buffered']
    #allocation6 [shape = 's32[1]{0}', space=sflag, size = 0x4, scoped, tag = 'scoped memory for tpu_custom_call.1']
    #allocation7 [shape = 'u8[512]{0}', space=vmem, size = 0x400, scoped, tag = 'input window, operand 6, single buffered']
    #allocation8 [shape = 'u8[512]{0}', space=vmem, size = 0x400, scoped, tag = 'input window, operand 8, single buffered']
    #allocation9 [shape = 's32[1]{0}', space=sflag, size = 0x4, scoped, tag = 'scoped memory for tpu_custom_call.1']
    #allocation10 [shape = 'u8[512]{0}', space=vmem, size = 0x400, scoped, tag = 'input window, operand 10, single buffered']
    #allocation11 [shape = 'u8[8192]{0}', space=vmem, size = 0x2000, scoped, tag = 'input window, operand 11, single buffered']
    #allocation12 [shape = 's32[1]{0}', space=sflag, size = 0x4, scoped, tag = 'scoped memory for tpu_custom_call.1']
    #allocation13 [shape = 'u8[512]{0}', space=vmem, size = 0x400, scoped, tag = 'input window, operand 12, single buffered']
    #allocation14 [shape = 'u8[1024]{0}', space=vmem, size = 0x400, scoped, tag = 'output window, operand 0, single buffered']
    %20 = vsyncpa [#allocation3], 0
    %21 = vsyncpa [#allocation6], 0
    %22 = vsyncpa [#allocation9], 0
    %23 = vsyncpa [#allocation12], 0
    %24 = vsyncpa [#allocation4], 0
    // Predicated region
    $region2: #{tpu_custom_call.1} parent=1 // pred_check
      _
    $region3: #{tpu_custom_call.1} parent=1 // pred_check_branch
      %26 = sbr.rel (0) target = $region5
    $region4: #{tpu_custom_call.1} parent=1 // pred_region
      _
    $region5: #{tpu_custom_call.1} parent=1 // pred_fallthru
      _
    // Predicated region
    $region6: #{tpu_custom_call.1} parent=1 // pred_check
      _
    $region7: #{tpu_custom_call.1} parent=1 // pred_check_branch
      %28 = sbr.rel (0) target = $region9
    $region8: #{tpu_custom_call.1} parent=1 // pred_region
      _
    $region9: #{tpu_custom_call.1} parent=1 // pred_fallthru
      _
    // Predicated region
    $region10: #{tpu_custom_call.1} parent=1 // pred_check
      _
    $region11: #{tpu_custom_call.1} parent=1 // pred_check_branch
      %30 = sbr.rel (0) target = $region13
    $region12: #{tpu_custom_call.1} parent=1 // pred_region
      %s32 = ssub.s32 32, 32
      %33 = vsyncadd [#allocation3], %s32
      %s35 = sshll.u32 [#allocation2], 4
      %s36 = int_to_ptr.vmem [resolvable:$true] %s35
      %38 = dma.hbm_to_vmem [thread:$0]  %s2, 32, %s36, [#allocation3]
    $region13: #{tpu_custom_call.1} parent=1 // pred_fallthru
      _
    // Predicated region
    $region14: #{tpu_custom_call.1} parent=1 // pred_check
      _
    $region15: #{tpu_custom_call.1} parent=1 // pred_check_branch
      %40 = sbr.rel (0) target = $region17
    $region16: #{tpu_custom_call.1} parent=1 // pred_region
      _
    $region17: #{tpu_custom_call.1} parent=1 // pred_fallthru
      _
    // Predicated region
    $region18: #{tpu_custom_call.1} parent=1 // pred_check
      _
    $region19: #{tpu_custom_call.1} parent=1 // pred_check_branch
      %42 = sbr.rel (0) target = $region21
    $region20: #{tpu_custom_call.1} parent=1 // pred_region
      %s44 = ssub.s32 16, 16
      %45 = vsyncadd [#allocation6], %s44
      %s47 = sshll.u32 [#allocation5], 4
      %s48 = int_to_ptr.vmem [resolvable:$true] %s47
      %50 = dma.hbm_to_vmem [thread:$0]  %s4, 16, %s48, [#allocation6]
    $region21: #{tpu_custom_call.1} parent=1 // pred_fallthru
      _
    // Predicated region
    $region22: #{tpu_custom_call.1} parent=1 // pred_check
      _
    $region23: #{tpu_custom_call.1} parent=1 // pred_check_branch
      %52 = sbr.rel (0) target = $region25
    $region24: #{tpu_custom_call.1} parent=1 // pred_region
      _
    $region25: #{tpu_custom_call.1} parent=1 // pred_fallthru
      _
    // Predicated region
    $region26: #{tpu_custom_call.1} parent=1 // pred_check
      _
    $region27: #{tpu_custom_call.1} parent=1 // pred_check_branch
      %54 = sbr.rel (0) target = $region29
    $region28: #{tpu_custom_call.1} parent=1 // pred_region
      %s56 = ssub.s32 16, 16
      %57 = vsyncadd [#allocation6], %s56
      %s59 = sshll.u32 [#allocation7], 4
      %s60 = int_to_ptr.vmem [resolvable:$true] %s59
      %62 = dma.hbm_to_vmem [thread:$0]  %s6, 16, %s60, [#allocation6]
    $region29: #{tpu_custom_call.1} parent=1 // pred_fallthru
      _
    // Predicated region
    $region30: #{tpu_custom_call.1} parent=1 // pred_check
      _
    $region31: #{tpu_custom_call.1} parent=1 // pred_check_branch
      %64 = sbr.rel (0) target = $region33
    $region32: #{tpu_custom_call.1} parent=1 // pred_region
      _
    $region33: #{tpu_custom_call.1} parent=1 // pred_fallthru
      _
    // Predicated region
    $region34: #{tpu_custom_call.1} parent=1 // pred_check
      _
    $region35: #{tpu_custom_call.1} parent=1 // pred_check_branch
      %66 = sbr.rel (0) target = $region37
    $region36: #{tpu_custom_call.1} parent=1 // pred_region
      %s68 = ssub.s32 16, 16
      %69 = vsyncadd [#allocation9], %s68
      %s71 = sshll.u32 [#allocation8], 4
      %s72 = int_to_ptr.vmem [resolvable:$true] %s71
      %74 = dma.hbm_to_vmem [thread:$0]  %s8, 16, %s72, [#allocation9]
    $region37: #{tpu_custom_call.1} parent=1 // pred_fallthru
      _
    // Predicated region
    $region38: #{tpu_custom_call.1} parent=1 // pred_check
      _
    $region39: #{tpu_custom_call.1} parent=1 // pred_check_branch
      %76 = sbr.rel (0) target = $region41
    $region40: #{tpu_custom_call.1} parent=1 // pred_region
      _
    $region41: #{tpu_custom_call.1} parent=1 // pred_fallthru
      _
    // Predicated region
    $region42: #{tpu_custom_call.1} parent=1 // pred_check
      _
    $region43: #{tpu_custom_call.1} parent=1 // pred_check_branch
      %78 = sbr.rel (0) target = $region45
    $region44: #{tpu_custom_call.1} parent=1 // pred_region
      %s80 = ssub.s32 16, 16
      %81 = vsyncadd [#allocation9], %s80
      %s83 = sshll.u32 [#allocation10], 4
      %s84 = int_to_ptr.vmem [resolvable:$true] %s83
      %86 = dma.hbm_to_vmem [thread:$0]  %s10, 16, %s84, [#allocation9]
    $region45: #{tpu_custom_call.1} parent=1 // pred_fallthru
      _
    // Predicated region
    $region46: #{tpu_custom_call.1} parent=1 // pred_check
      _
    $region47: #{tpu_custom_call.1} parent=1 // pred_check_branch
      %88 = sbr.rel (0) target = $region49
    $region48: #{tpu_custom_call.1} parent=1 // pred_region
      %s90 = ssub.s32 256, 256
      %91 = vsyncadd [#allocation12], %s90
      %s92 = sshll.u32 [#allocation11], 4
      %s93 = int_to_ptr.vmem [resolvable:$true] %s92
      %98 = dma.hbm_to_vmem [thread:$0]  %s11, 256, %s93, [#allocation12], 64, 64, 4
    $region49: #{tpu_custom_call.1} parent=1 // pred_fallthru
      _
    // Predicated region
    $region50: #{tpu_custom_call.1} parent=1 // pred_check
      _
    $region51: #{tpu_custom_call.1} parent=1 // pred_check_branch
      %100 = sbr.rel (0) target = $region53
    $region52: #{tpu_custom_call.1} parent=1 // pred_region
      %s102 = ssub.s32 16, 16
      %103 = vsyncadd [#allocation12], %s102
      %s105 = sshll.u32 [#allocation13], 4
      %s106 = int_to_ptr.vmem [resolvable:$true] %s105
      %108 = dma.hbm_to_vmem [thread:$0]  %s12, 16, %s106, [#allocation12]
    $region53: #{tpu_custom_call.1} parent=1 // pred_fallthru
      _
    // Predicated region
    $region54: #{tpu_custom_call.1} parent=1 // pred_check
      _
    $region55: #{tpu_custom_call.1} parent=1 // pred_check_branch
      %110 = sbr.rel (0) target = $region57
    $region56: #{tpu_custom_call.1} parent=1 // pred_region
      _
    $region57: #{tpu_custom_call.1} parent=1 // pred_fallthru
      _
    // Predicated region
    $region58: #{tpu_custom_call.1} parent=1 // pred_check
      _
    $region59: #{tpu_custom_call.1} parent=1 // pred_check_branch
      %112 = sbr.rel (0) target = $region61
    $region60: #{tpu_custom_call.1} parent=1 // pred_region
      _
    $region61: #{tpu_custom_call.1} parent=1 // pred_fallthru
      _
    // Predicated region
    $region62: #{tpu_custom_call.1} parent=1 // pred_check
      _
    $region63: #{tpu_custom_call.1} parent=1 // pred_check_branch
      %114 = sbr.rel (0) target = $region65
    $region64: #{tpu_custom_call.1} parent=1 // pred_region
      %115 = dma.done [#allocation3], 32
    $region65: #{tpu_custom_call.1} parent=1 // pred_fallthru
      _
    // Predicated region
    $region66: #{tpu_custom_call.1} parent=1 // pred_check
      _
    $region67: #{tpu_custom_call.1} parent=1 // pred_check_branch
      %117 = sbr.rel (0) target = $region69
    $region68: #{tpu_custom_call.1} parent=1 // pred_region
      %118 = dma.done [#allocation6], 16
    $region69: #{tpu_custom_call.1} parent=1 // pred_fallthru
      _
    // Predicated region
    $region70: #{tpu_custom_call.1} parent=1 // pred_check
      _
    $region71: #{tpu_custom_call.1} parent=1 // pred_check_branch
      %120 = sbr.rel (0) target = $region73
    $region72: #{tpu_custom_call.1} parent=1 // pred_region
      %121 = dma.done [#allocation6], 16
    $region73: #{tpu_custom_call.1} parent=1 // pred_fallthru
      _
    // Predicated region
    $region74: #{tpu_custom_call.1} parent=1 // pred_check
      _
    $region75: #{tpu_custom_call.1} parent=1 // pred_check_branch
      %123 = sbr.rel (0) target = $region77
    $region76: #{tpu_custom_call.1} parent=1 // pred_region
      %124 = dma.done [#allocation9], 16
    $region77: #{tpu_custom_call.1} parent=1 // pred_fallthru
      _
    // Predicated region
    $region78: #{tpu_custom_call.1} parent=1 // pred_check
      _
    $region79: #{tpu_custom_call.1} parent=1 // pred_check_branch
      %126 = sbr.rel (0) target = $region81
    $region80: #{tpu_custom_call.1} parent=1 // pred_region
      %127 = dma.done [#allocation9], 16
    $region81: #{tpu_custom_call.1} parent=1 // pred_fallthru
      _
    // Predicated region
    $region82: #{tpu_custom_call.1} parent=1 // pred_check
      _
    $region83: #{tpu_custom_call.1} parent=1 // pred_check_branch
      %129 = sbr.rel (0) target = $region85
    $region84: #{tpu_custom_call.1} parent=1 // pred_region
      %130 = dma.done [#allocation12], 256
    $region85: #{tpu_custom_call.1} parent=1 // pred_fallthru
      _
    // Predicated region
    $region86: #{tpu_custom_call.1} parent=1 // pred_check
      _
    $region87: #{tpu_custom_call.1} parent=1 // pred_check_branch
      %132 = sbr.rel (0) target = $region89
    $region88: #{tpu_custom_call.1} parent=1 // pred_region
      %133 = dma.done [#allocation12], 16
    $region89: #{tpu_custom_call.1} parent=1 // pred_fallthru
      _
    %v135 = vld [vmem:[%s0] sm:$0xf]
    %v136 = vld [vmem:[%s0 + $0x4] sm:$0xf]
    %v137 = vld [vmem:[%s1] sm:$0xf]
    %v138 = vld [vmem:[%s1 + $0x4] sm:$0xf]
    %v139 = vld [vmem:[#allocation2] sm:$0x3]
    %v140 = vld [vmem:[%s3] sm:$0x1]
    %v143 = vunpack.c.l.b16 %v137
    %v144 = vunpack.c.l.b16 %v138
    %v145 = vpack.c.b16 %v144, %v143
    %vm146 = vcmask 7168
    %v148 = vsel %vm146, %v145, 0
    %vm150 = vcmask 1040384
    %v151 = vsel 0, 4294967295, 65535
    %v152 = vsel %vm150, %v151, 0
    %v154 = vand.u32 %v140, %v152
    %156 = vmatprep.subr.bf16.mxu0 0
    %157 = vmatpush1.bf16.msra.mxu0 %v154
    %158 = vmatprep.subr.bf16.mxu0 0
    %159 = vmatpush1.bf16.msra.mxu0 0
    %160 = vmatprep.subr.bf16.mxu0 0
    %161 = vmatpush1.bf16.msra.mxu0 0
    %162 = vmatprep.subr.bf16.mxu0 0
    %163 = vmatpush1.bf16.msra.mxu0 0
    %164 = vmatprep.subr.bf16.mxu0 0
    %165 = vmatpush1.bf16.msra.mxu0 0
    %166 = vmatprep.subr.bf16.mxu0 0
    %167 = vmatpush1.bf16.msra.mxu0 0
    %168 = vmatprep.subr.bf16.mxu0 0
    %169 = vmatpush1.bf16.msra.mxu0 0
    %170 = vmatprep.subr.bf16.mxu0 0
    %171 = vmatpush1.bf16.msra.mxu0 0
    %172 = vmatprep.subr.bf16.mxu0 0
    %173 = vmatpush1.bf16.msra.mxu0 0
    %174 = vmatprep.subr.bf16.mxu0 0
    %175 = vmatpush1.bf16.msra.mxu0 0
    %176 = vmatprep.subr.bf16.mxu0 0
    %177 = vmatpush1.bf16.msra.mxu0 0
    %178 = vmatprep.subr.bf16.mxu0 0
    %179 = vmatpush1.bf16.msra.mxu0 0
    %180 = vmatprep.subr.bf16.mxu0 0
    %181 = vmatpush1.bf16.msra.mxu0 0
    %182 = vmatprep.subr.bf16.mxu0 0
    %183 = vmatpush1.bf16.msra.mxu0 0
    %184 = vmatprep.subr.bf16.mxu0 0
    %185 = vmatpush1.bf16.msra.mxu0 0
    %186 = vmatprep.subr.bf16.mxu0 0
    %187 = vmatpush1.bf16.msra.mxu0 0
    %188 = vmatprep.mubr.bf16.mxu0 0
    %189 = vmatmul.mubr.bf16.gmra.mrb[0].mxu0 %v148
    %v190 = vpop.f32.mrb[0].mxu0
    %v191 = vadd.f32 0.0, %v190
    %v192 = vpop.f32.mrb[0].mxu0
    %v193 = vpop.f32.mrb[0].mxu0
    %v194 = vadd.f32 0.0, %v193
    %v195 = vpop.f32.mrb[0].mxu0
    %196 = vdwg.mxu0
    %v199 = vunpack.c.l.b16 %v135
    %v200 = vunpack.c.l.b16 %v136
    %v201 = vpack.c.b16 %v200, %v199
    %vm202 = vcmask 23552
    %v204 = vsel %vm202, %v201, 0
    %vm206 = vcmask 1041408
    %v207 = vsel %vm150, 4294967295, 65535
    %v208 = vsel %vm206, %v207, 0
    %v210 = vand.u32 %v139, %v208
    %212 = vmatprep.subr.bf16.mxu0 0
    %213 = vmatpush1.bf16.msra.mxu0 %v210
    %214 = vmatprep.subr.bf16.mxu0 0
    %215 = vmatpush1.bf16.msra.mxu0 0
    %216 = vmatprep.subr.bf16.mxu0 0
    %217 = vmatpush1.bf16.msra.mxu0 0
    %218 = vmatprep.subr.bf16.mxu0 0
    %219 = vmatpush1.bf16.msra.mxu0 0
    %220 = vmatprep.subr.bf16.mxu0 0
    %221 = vmatpush1.bf16.msra.mxu0 0
    %222 = vmatprep.subr.bf16.mxu0 0
    %223 = vmatpush1.bf16.msra.mxu0 0
    %224 = vmatprep.subr.bf16.mxu0 0
    %225 = vmatpush1.bf16.msra.mxu0 0
    %226 = vmatprep.subr.bf16.mxu0 0
    %227 = vmatpush1.bf16.msra.mxu0 0
    %228 = vmatprep.subr.bf16.mxu0 0
    %229 = vmatpush1.bf16.msra.mxu0 0
    %230 = vmatprep.subr.bf16.mxu0 0
    %231 = vmatpush1.bf16.msra.mxu0 0
    %232 = vmatprep.subr.bf16.mxu0 0
    %233 = vmatpush1.bf16.msra.mxu0 0
    %234 = vmatprep.subr.bf16.mxu0 0
    %235 = vmatpush1.bf16.msra.mxu0 0
    %236 = vmatprep.subr.bf16.mxu0 0
    %237 = vmatpush1.bf16.msra.mxu0 0
    %238 = vmatprep.subr.bf16.mxu0 0
    %239 = vmatpush1.bf16.msra.mxu0 0
    %240 = vmatprep.subr.bf16.mxu0 0
    %241 = vmatpush1.bf16.msra.mxu0 0
    %242 = vmatprep.subr.bf16.mxu0 0
    %243 = vmatpush1.bf16.msra.mxu0 0
    %244 = vmatprep.mubr.bf16.mxu0 0
    %245 = vmatmul.mubr.bf16.gmra.mrb[0].mxu0 %v204
    %v246 = vpop.f32.mrb[0].mxu0
    %v247 = vadd.f32 %v191, %v246
    %v248 = vpop.f32.mrb[0].mxu0
    %v249 = vpop.f32.mrb[0].mxu0
    %v250 = vadd.f32 %v194, %v249
    %v251 = vpop.f32.mrb[0].mxu0
    %252 = vdwg.mxu0
    %v253 = vld [vmem:[#allocation5] sm:$0x1]
    %v255 = vlaneseq
    %v256 = vshrl.u32 %v255, 7
    %v257 = vsub.s32 0, %v256
    %v258 = vrot.slane %v253, %v257
    %v260 = vadd.f32 %v247, %v258
    %v261 = vadd.f32 %v250, %v258
    %v262 = vmax.f32 %v260, 0.0
    %v263 = vmax.f32 %v261, 0.0
    %v264 = vpack.c.bf16 %v263, %v262
    %v265 = vld [vmem:[%s5] sm:$0xf]
    %v266 = vld [vmem:[%s5 + $0x4] sm:$0xf]
    %v267 = vld [vmem:[%s5 + $0x8] sm:$0xf]
    %v268 = vld [vmem:[%s5 + $0xc] sm:$0xf]
    %v269 = vld [vmem:[#allocation7] sm:$0x1]
    %v271 = vlaneseq
    %v272 = vshrl.u32 %v271, 7
    %v273 = vsub.s32 0, %v272
    %v274 = vrot.slane %v269, %v273
    %v280 = vunpack.c.l.b16 %v265
    %v281 = vunpack.c.l.b16 %v266
    %v282 = vunpack.c.l.b16 %v267
    %v283 = vunpack.c.l.b16 %v268
    %v284 = vpack.c.b16 %v281, %v280
    %v285 = vpack.c.b16 %v283, %v282
    %vm288 = vcmask 261120
    %v290 = vsel %vm288, %v264, 0
    %292 = vmatprep.subr.bf16.mxu0 0
    %293 = vmatpush1.bf16.msra.mxu0 %v284
    %294 = vmatprep.subr.bf16.mxu0 0
    %295 = vmatpush1.bf16.msra.mxu0 %v285
    %296 = vmatprep.subr.bf16.mxu0 0
    %297 = vmatpush1.bf16.msra.mxu0 0
    %298 = vmatprep.subr.bf16.mxu0 0
    %299 = vmatpush1.bf16.msra.mxu0 0
    %300 = vmatprep.subr.bf16.mxu0 0
    %301 = vmatpush1.bf16.msra.mxu0 0
    %302 = vmatprep.subr.bf16.mxu0 0
    %303 = vmatpush1.bf16.msra.mxu0 0
    %304 = vmatprep.subr.bf16.mxu0 0
    %305 = vmatpush1.bf16.msra.mxu0 0
    %306 = vmatprep.subr.bf16.mxu0 0
    %307 = vmatpush1.bf16.msra.mxu0 0
    %308 = vmatprep.subr.bf16.mxu0 0
    %309 = vmatpush1.bf16.msra.mxu0 0
    %310 = vmatprep.subr.bf16.mxu0 0
    %311 = vmatpush1.bf16.msra.mxu0 0
    %312 = vmatprep.subr.bf16.mxu0 0
    %313 = vmatpush1.bf16.msra.mxu0 0
    %314 = vmatprep.subr.bf16.mxu0 0
    %315 = vmatpush1.bf16.msra.mxu0 0
    %316 = vmatprep.subr.bf16.mxu0 0
    %317 = vmatpush1.bf16.msra.mxu0 0
    %318 = vmatprep.subr.bf16.mxu0 0
    %319 = vmatpush1.bf16.msra.mxu0 0
    %320 = vmatprep.subr.bf16.mxu0 0
    %321 = vmatpush1.bf16.msra.mxu0 0
    %322 = vmatprep.subr.bf16.mxu0 0
    %323 = vmatpush1.bf16.msra.mxu0 0
    %324 = vmatprep.mubr.bf16.mxu0 0
    %325 = vmatmul.mubr.bf16.gmra.mrb[0].mxu0 %v290
    %v326 = vpop.f32.mrb[0].mxu0
    %v327 = vadd.f32 %v274, %v326
    %v328 = vpop.f32.mrb[0].mxu0
    %v329 = vpop.f32.mrb[0].mxu0
    %v330 = vadd.f32 %v274, %v329
    %v331 = vpop.f32.mrb[0].mxu0
    %332 = vdwg.mxu0
    %v333 = vmax.f32 %v327, 0.0
    %v334 = vmax.f32 %v330, 0.0
    %v335 = vpack.c.bf16 %v334, %v333
    %v336 = vld [vmem:[%s7] sm:$0xf]
    %v337 = vld [vmem:[%s7 + $0x4] sm:$0xf]
    %v338 = vld [vmem:[%s7 + $0x8] sm:$0xf]
    %v339 = vld [vmem:[%s7 + $0xc] sm:$0xf]
    %v340 = vld [vmem:[#allocation8] sm:$0x1]
    %v342 = vlaneseq
    %v343 = vshrl.u32 %v342, 7
    %v344 = vsub.s32 0, %v343
    %v345 = vrot.slane %v340, %v344
    %v351 = vunpack.c.l.b16 %v336
    %v352 = vunpack.c.l.b16 %v337
    %v353 = vunpack.c.l.b16 %v338
    %v354 = vunpack.c.l.b16 %v339
    %v355 = vpack.c.b16 %v352, %v351
    %v356 = vpack.c.b16 %v354, %v353
    %v360 = vsel %vm288, %v335, 0
    %362 = vmatprep.subr.bf16.mxu0 0
    %363 = vmatpush1.bf16.msra.mxu0 %v355
    %364 = vmatprep.subr.bf16.mxu0 0
    %365 = vmatpush1.bf16.msra.mxu0 %v356
    %366 = vmatprep.subr.bf16.mxu0 0
    %367 = vmatpush1.bf16.msra.mxu0 0
    %368 = vmatprep.subr.bf16.mxu0 0
    %369 = vmatpush1.bf16.msra.mxu0 0
    %370 = vmatprep.subr.bf16.mxu0 0
    %371 = vmatpush1.bf16.msra.mxu0 0
    %372 = vmatprep.subr.bf16.mxu0 0
    %373 = vmatpush1.bf16.msra.mxu0 0
    %374 = vmatprep.subr.bf16.mxu0 0
    %375 = vmatpush1.bf16.msra.mxu0 0
    %376 = vmatprep.subr.bf16.mxu0 0
    %377 = vmatpush1.bf16.msra.mxu0 0
    %378 = vmatprep.subr.bf16.mxu0 0
    %379 = vmatpush1.bf16.msra.mxu0 0
    %380 = vmatprep.subr.bf16.mxu0 0
    %381 = vmatpush1.bf16.msra.mxu0 0
    %382 = vmatprep.subr.bf16.mxu0 0
    %383 = vmatpush1.bf16.msra.mxu0 0
    %384 = vmatprep.subr.bf16.mxu0 0
    %385 = vmatpush1.bf16.msra.mxu0 0
    %386 = vmatprep.subr.bf16.mxu0 0
    %387 = vmatpush1.bf16.msra.mxu0 0
    %388 = vmatprep.subr.bf16.mxu0 0
    %389 = vmatpush1.bf16.msra.mxu0 0
    %390 = vmatprep.subr.bf16.mxu0 0
    %391 = vmatpush1.bf16.msra.mxu0 0
    %392 = vmatprep.subr.bf16.mxu0 0
    %393 = vmatpush1.bf16.msra.mxu0 0
    %394 = vmatprep.mubr.bf16.mxu0 0
    %395 = vmatmul.mubr.bf16.gmra.mrb[0].mxu0 %v360
    %v396 = vpop.f32.mrb[0].mxu0
    %v397 = vadd.f32 %v345, %v396
    %v398 = vpop.f32.mrb[0].mxu0
    %v399 = vpop.f32.mrb[0].mxu0
    %v400 = vadd.f32 %v345, %v399
    %v401 = vpop.f32.mrb[0].mxu0
    %402 = vdwg.mxu0
    %v403 = vmax.f32 %v397, 0.0
    %v404 = vmax.f32 %v400, 0.0
    %v405 = vpack.c.bf16 %v404, %v403
    %v406 = vld [vmem:[%s9] sm:$0xf]
    %v407 = vld [vmem:[%s9 + $0x4] sm:$0xf]
    %v408 = vld [vmem:[%s9 + $0x8] sm:$0xf]
    %v409 = vld [vmem:[%s9 + $0xc] sm:$0xf]
    %v410 = vld [vmem:[#allocation10] sm:$0x1]
    %v412 = vlaneseq
    %v413 = vshrl.u32 %v412, 7
    %v414 = vsub.s32 0, %v413
    %v415 = vrot.slane %v410, %v414
    %v421 = vunpack.c.l.b16 %v406
    %v422 = vunpack.c.l.b16 %v407
    %v423 = vunpack.c.l.b16 %v408
    %v424 = vunpack.c.l.b16 %v409
    %v425 = vpack.c.b16 %v422, %v421
    %v426 = vpack.c.b16 %v424, %v423
    %v430 = vsel %vm288, %v405, 0
    %432 = vmatprep.subr.bf16.mxu0 0
    %433 = vmatpush1.bf16.msra.mxu0 %v425
    %434 = vmatprep.subr.bf16.mxu0 0
    %435 = vmatpush1.bf16.msra.mxu0 %v426
    %436 = vmatprep.subr.bf16.mxu0 0
    %437 = vmatpush1.bf16.msra.mxu0 0
    %438 = vmatprep.subr.bf16.mxu0 0
    %439 = vmatpush1.bf16.msra.mxu0 0
    %440 = vmatprep.subr.bf16.mxu0 0
    %441 = vmatpush1.bf16.msra.mxu0 0
    %442 = vmatprep.subr.bf16.mxu0 0
    %443 = vmatpush1.bf16.msra.mxu0 0
    %444 = vmatprep.subr.bf16.mxu0 0
    %445 = vmatpush1.bf16.msra.mxu0 0
    %446 = vmatprep.subr.bf16.mxu0 0
    %447 = vmatpush1.bf16.msra.mxu0 0
    %448 = vmatprep.subr.bf16.mxu0 0
    %449 = vmatpush1.bf16.msra.mxu0 0
    %450 = vmatprep.subr.bf16.mxu0 0
    %451 = vmatpush1.bf16.msra.mxu0 0
    %452 = vmatprep.subr.bf16.mxu0 0
    %453 = vmatpush1.bf16.msra.mxu0 0
    %454 = vmatprep.subr.bf16.mxu0 0
    %455 = vmatpush1.bf16.msra.mxu0 0
    %456 = vmatprep.subr.bf16.mxu0 0
    %457 = vmatpush1.bf16.msra.mxu0 0
    %458 = vmatprep.subr.bf16.mxu0 0
    %459 = vmatpush1.bf16.msra.mxu0 0
    %460 = vmatprep.subr.bf16.mxu0 0
    %461 = vmatpush1.bf16.msra.mxu0 0
    %462 = vmatprep.subr.bf16.mxu0 0
    %463 = vmatpush1.bf16.msra.mxu0 0
    %464 = vmatprep.mubr.bf16.mxu0 0
    %465 = vmatmul.mubr.bf16.gmra.mrb[0].mxu0 %v430
    %v466 = vpop.f32.mrb[0].mxu0
    %v467 = vadd.f32 %v415, %v466
    %v468 = vpop.f32.mrb[0].mxu0
    %v469 = vpop.f32.mrb[0].mxu0
    %v470 = vadd.f32 %v415, %v469
    %v471 = vpop.f32.mrb[0].mxu0
    %472 = vdwg.mxu0
    %v473 = vsel %vm288, %v467, 0.0
    %v474 = vrot.slane %v473, 4
    %v475 = vadd.f32 %v473, %v474
    %v476 = vrot.slane %v475, 2
    %v477 = vadd.f32 %v475, %v476
    %v478 = vrot.slane %v477, 1
    %v479 = vadd.f32 %v477, %v478
    %v480 = vsel %vm288, %v470, 0.0
    %v481 = vrot.slane %v480, 4
    %v482 = vadd.f32 %v480, %v481
    %v483 = vrot.slane %v482, 2
    %v484 = vadd.f32 %v482, %v483
    %v485 = vrot.slane %v484, 1
    %v486 = vadd.f32 %v484, %v485
    %v487 = vrcp.pop 8.0
    %v488 = vmul.f32 %v479, %v487
    %v489 = vmul.f32 %v486, %v487
    %v490 = vpack.c.bf16 %v488, %v488
    %v491 = vpack.c.bf16 %v489, %v489
    %v492 = vld [vmem:[#allocation11] sm:$0xf]
    %v493 = vld [vmem:[#allocation11 + $0x4] sm:$0xf]
    %v494 = vld [vmem:[#allocation11 + $0x8] sm:$0xf]
    %v495 = vld [vmem:[#allocation11 + $0xc] sm:$0xf]
    %v496 = vld [vmem:[#allocation13] sm:$0x1]
    %v498 = vlaneseq
    %v499 = vshrl.u32 %v498, 7
    %v500 = vsub.s32 0, %v499
    %v501 = vrot.slane %v496, %v500
    %v505 = vunpack.c.l.b16 %v490
    %v506 = vunpack.c.l.b16 %v491
    %vm507 = vcmask 1041409
    %v508 = vsel %vm507, %v506, %v505
    %v509 = vpack.c.b16 %v508, %v508
    %v514 = vunpack.c.l.b16 %v492
    %v515 = vunpack.c.l.b16 %v493
    %v516 = vunpack.c.l.b16 %v494
    %v517 = vunpack.c.l.b16 %v495
    %v518 = vpack.c.b16 %v515, %v514
    %v519 = vpack.c.b16 %v517, %v516
    %v523 = vsel %vm288, %v509, 0
    %525 = vmatprep.subr.bf16.mxu0 0
    %526 = vmatpush1.bf16.msra.mxu0 %v518
    %527 = vmatprep.subr.bf16.mxu0 0
    %528 = vmatpush1.bf16.msra.mxu0 %v519
    %529 = vmatprep.subr.bf16.mxu0 0
    %530 = vmatpush1.bf16.msra.mxu0 0
    %531 = vmatprep.subr.bf16.mxu0 0
    %532 = vmatpush1.bf16.msra.mxu0 0
    %533 = vmatprep.subr.bf16.mxu0 0
    %534 = vmatpush1.bf16.msra.mxu0 0
    %535 = vmatprep.subr.bf16.mxu0 0
    %536 = vmatpush1.bf16.msra.mxu0 0
    %537 = vmatprep.subr.bf16.mxu0 0
    %538 = vmatpush1.bf16.msra.mxu0 0
    %539 = vmatprep.subr.bf16.mxu0 0
    %540 = vmatpush1.bf16.msra.mxu0 0
    %541 = vmatprep.subr.bf16.mxu0 0
    %542 = vmatpush1.bf16.msra.mxu0 0
    %543 = vmatprep.subr.bf16.mxu0 0
    %544 = vmatpush1.bf16.msra.mxu0 0
    %545 = vmatprep.subr.bf16.mxu0 0
    %546 = vmatpush1.bf16.msra.mxu0 0
    %547 = vmatprep.subr.bf16.mxu0 0
    %548 = vmatpush1.bf16.msra.mxu0 0
    %549 = vmatprep.subr.bf16.mxu0 0
    %550 = vmatpush1.bf16.msra.mxu0 0
    %551 = vmatprep.subr.bf16.mxu0 0
    %552 = vmatpush1.bf16.msra.mxu0 0
    %553 = vmatprep.subr.bf16.mxu0 0
    %554 = vmatpush1.bf16.msra.mxu0 0
    %555 = vmatprep.subr.bf16.mxu0 0
    %556 = vmatpush1.bf16.msra.mxu0 0
    %557 = vmatprep.mubr.bf16.mxu0 0
    %558 = vmatmul.mubr.bf16.gmra.mrb[0].mxu0 %v523
    %v559 = vpop.f32.mrb[0].mxu0
    %v560 = vadd.f32 %v501, %v559
    %v561 = vpop.f32.mrb[0].mxu0
    %v562 = vpop.f32.mrb[0].mxu0
    %v563 = vpop.f32.mrb[0].mxu0
    %564 = vdwg.mxu0
    %v565 = vmax.f32 %v560, 0.0
    %v566 = vpack.c.bf16 %v565, %v565
    %v567 = vld [vmem:[%s13] sm:$0xf]
    %v568 = vld [vmem:[%s13 + $0x4] sm:$0xf]
    %v569 = vld [vmem:[%s13 + $0x8] sm:$0xf]
    %v570 = vld [vmem:[%s13 + $0xc] sm:$0xf]
    %v571 = vld [vmem:[%s14] sm:$0x1]
    %v573 = vlaneseq
    %v574 = vshrl.u32 %v573, 7
    %v575 = vsub.s32 0, %v574
    %v576 = vrot.slane %v571, %v575
    %v582 = vunpack.c.l.b16 %v567
    %v583 = vunpack.c.l.b16 %v568
    %v584 = vunpack.c.l.b16 %v569
    %v585 = vunpack.c.l.b16 %v570
    %v586 = vpack.c.b16 %v583, %v582
    %v587 = vpack.c.b16 %v585, %v584
    %v591 = vsel %vm288, %v566, 0
    %593 = vmatprep.subr.bf16.mxu0 0
    %594 = vmatpush1.bf16.msra.mxu0 %v586
    %595 = vmatprep.subr.bf16.mxu0 0
    %596 = vmatpush1.bf16.msra.mxu0 %v587
    %597 = vmatprep.subr.bf16.mxu0 0
    %598 = vmatpush1.bf16.msra.mxu0 0
    %599 = vmatprep.subr.bf16.mxu0 0
    %600 = vmatpush1.bf16.msra.mxu0 0
    %601 = vmatprep.subr.bf16.mxu0 0
    %602 = vmatpush1.bf16.msra.mxu0 0
    %603 = vmatprep.subr.bf16.mxu0 0
    %604 = vmatpush1.bf16.msra.mxu0 0
    %605 = vmatprep.subr.bf16.mxu0 0
    %606 = vmatpush1.bf16.msra.mxu0 0
    %607 = vmatprep.subr.bf16.mxu0 0
    %608 = vmatpush1.bf16.msra.mxu0 0
    %609 = vmatprep.subr.bf16.mxu0 0
    %610 = vmatpush1.bf16.msra.mxu0 0
    %611 = vmatprep.subr.bf16.mxu0 0
    %612 = vmatpush1.bf16.msra.mxu0 0
    %613 = vmatprep.subr.bf16.mxu0 0
    %614 = vmatpush1.bf16.msra.mxu0 0
    %615 = vmatprep.subr.bf16.mxu0 0
    %616 = vmatpush1.bf16.msra.mxu0 0
    %617 = vmatprep.subr.bf16.mxu0 0
    %618 = vmatpush1.bf16.msra.mxu0 0
    %619 = vmatprep.subr.bf16.mxu0 0
    %620 = vmatpush1.bf16.msra.mxu0 0
    %621 = vmatprep.subr.bf16.mxu0 0
    %622 = vmatpush1.bf16.msra.mxu0 0
    %623 = vmatprep.subr.bf16.mxu0 0
    %624 = vmatpush1.bf16.msra.mxu0 0
    %625 = vmatprep.mubr.bf16.mxu0 0
    %626 = vmatmul.mubr.bf16.gmra.mrb[0].mxu0 %v591
    %v627 = vpop.f32.mrb[0].mxu0
    %v628 = vadd.f32 %v576, %v627
    %v629 = vpop.f32.mrb[0].mxu0
    %v630 = vpop.f32.mrb[0].mxu0
    %v631 = vpop.f32.mrb[0].mxu0
    %632 = vdwg.mxu0
    %vm633 = vcmask 254976
    %634 = vst.msk [vmem:[#allocation14] sm:$0x3] %vm633, %v628
    // Predicated region
    $region90: #{tpu_custom_call.1} parent=1 // pred_check
      _
    $region91: #{tpu_custom_call.1} parent=1 // pred_check_branch
      %636 = sbr.rel (0) target = $region93
    $region92: #{tpu_custom_call.1} parent=1 // pred_region
      %s638 = ssub.s32 32, 32
      %639 = vsyncadd [#allocation4], %s638
      %s641 = sshll.u32 [#allocation14], 4
      %s642 = int_to_ptr.vmem [resolvable:$true] %s641
      %644 = dma.vmem_to_hbm [thread:$0]  %s642, 32, %s15, [#allocation4]
    $region93: #{tpu_custom_call.1} parent=1 // pred_fallthru
      _
    // Predicated region
    $region94: #{tpu_custom_call.1} parent=1 // pred_check
      _
    $region95: #{tpu_custom_call.1} parent=1 // pred_check_branch
      %646 = sbr.rel (0) target = $region97
    $region96: #{tpu_custom_call.1} parent=1 // pred_region
      %647 = dma.done [#allocation4], 32
    $region97: #{tpu_custom_call.1} parent=1 // pred_fallthru
      _
    %648 = vsyncpa [#allocation3], 1
    %649 = vsyncpa [#allocation6], 1
    %650 = vsyncpa [#allocation9], 1
    %651 = vsyncpa [#allocation12], 1
    %652 = vsyncpa [#allocation4], 1

</llo_original>
